<compile_context>
chip_gen: v5e
topology: v5e:2x2
jax: 0.10.0
libtpu: 0.0.40
codegen_flags: <defaults>
</compile_context>

<pallas_src>
import math
import functools

import jax
import jax.numpy as jnp
from jax.experimental import pallas as pl
from jax.experimental.pallas import tpu as pltpu  # noqa: F401


def _sdpa_kernel(*refs, scale, num_heads, d_v, has_mask):
    if has_mask:
        q_ref, k_ref, v_ref, mask_ref, o_ref = refs
    else:
        q_ref, k_ref, v_ref, o_ref = refs
        mask_ref = None

    q = q_ref[...]            # (H, S, d_k)
    k = k_ref[...]            # (H, S, d_k)
    v = v_ref[...]            # (H, S, d_v)

    # scores = Q @ K^T / sqrt(d_k): last-dim contraction, no transposed copy of K.
    scores = jnp.einsum("hqd,hkd->hqk", q, k,
                        preferred_element_type=jnp.float32) * scale

    if has_mask:
        # masked_fill(mask == 0, -1e9); mask is (S, S), shared across heads.
        masked = (mask_ref[...] == 0)[None, :, :]
        scores = jnp.where(masked, jnp.float32(-1.0e9), scores)

    # Numerically-stable softmax along the last axis (matches torch.softmax).
    m = jnp.max(scores, axis=-1, keepdims=True)
    e = jnp.exp(scores - m)
    denom = jnp.sum(e, axis=-1, keepdims=True)
    weights = e * pl.reciprocal(denom, approx=True)   # EUP vrcp; VPU stays free

    # Per-head output (H, S, d_v), f32 accumulation on the MXU.
    out = jnp.einsum("hqk,hkd->hqd", weights.astype(v.dtype), v,
                     preferred_element_type=jnp.float32)

    # Lane-dense store: concatenate heads along lanes -> (S, H*d_v).
    if num_heads == 1:
        dense = out[0]
    else:
        dense = jnp.concatenate([out[h] for h in range(num_heads)], axis=-1)
    o_ref[...] = dense.astype(o_ref.dtype)


def scaled_dot_product_attention(Q, K, V, mask=None):
    """Pallas equivalent of ScaledDotProductAttention.forward.

    Module-faithful 2-D layout:  Q/K/V [S, d]      -> returns [S, d_v]
    Fused multi-head layout:     Q/K/V [H, S, d]   -> returns [H, S, d_v]
    mask: [S, S] with 0 == masked-out, or None.
    """
    single_head_2d = (Q.ndim == 2)
    if single_head_2d:
        Q, K, V = Q[None], K[None], V[None]

    H, S, d_k = Q.shape
    d_v = V.shape[-1]
    scale = 1.0 / math.sqrt(d_k)
    has_mask = mask is not None

    kernel = functools.partial(_sdpa_kernel, scale=scale, num_heads=H,
                               d_v=d_v, has_mask=has_mask)

    # Tiny operands (tens of KiB total): one full VMEM block each, no grid,
    # single launch. Output block is the lane-dense (S, H*d_v) slab.
    in_specs = [
        pl.BlockSpec((H, S, d_k), lambda: (0, 0, 0)),
        pl.BlockSpec((H, S, d_k), lambda: (0, 0, 0)),
        pl.BlockSpec((H, S, d_v), lambda: (0, 0, 0)),
    ]
    inputs = [Q, K, V]
    if has_mask:
        in_specs.append(pl.BlockSpec((S, S), lambda: (0, 0)))
        inputs.append(mask.astype(jnp.int32))

    out = pl.pallas_call(
        kernel,
        out_shape=jax.ShapeDtypeStruct((S, H * d_v), Q.dtype),
        in_specs=in_specs,
        out_specs=pl.BlockSpec((S, H * d_v), lambda: (0, 0)),
    )(*inputs)

    # (S, H*d_v) -> (H, S, d_v): layout plumbing outside the kernel.
    out = out.reshape(S, H, d_v).transpose(1, 0, 2)
    if single_head_2d:
        out = out[0]
    return out


def _reference(Q, K, V, mask=None):
    d_k = Q.shape[-1]
    scores = (Q @ K.T) / math.sqrt(d_k)
    if mask is not None:
        scores = jnp.where(mask == 0, -1.0e9, scores)
    w = jax.nn.softmax(scores, axis=-1)
    return w @ V


if __name__ == "__main__":
    # Shapes implied by the module: d_model=512, num_heads=8 -> d_k = d_v = 64.
    seq_len, num_heads = 8, 8
    d_k = d_v = 512 // num_heads

    key = jax.random.PRNGKey(0)
    kq, kk, kv = jax.random.split(key, 3)
    Q = jax.random.normal(kq, (num_heads, seq_len, d_k), dtype=jnp.float32)
    K = jax.random.normal(kk, (num_heads, seq_len, d_k), dtype=jnp.float32)
    V = jax.random.normal(kv, (num_heads, seq_len, d_v), dtype=jnp.float32)
    # Causal-style 0/1 mask like the PyTorch usage (mask == 0 -> masked out).
    mask = jnp.tril(jnp.ones((seq_len, seq_len), dtype=jnp.int32))

    # Tolerance: the EUP approximate reciprocal in the softmax normalization is
    # good to roughly ~1e-3 relative; outputs here are O(1).
    ATOL = RTOL = 2e-3

    # Fused multi-head path (all 8 heads in one pallas_call, with mask).
    out = scaled_dot_product_attention(Q, K, V, mask)
    jax.block_until_ready(out)
    ref = jax.vmap(lambda q, k, v: _reference(q, k, v, mask))(Q, K, V)
    assert out.shape == (num_heads, seq_len, d_v)
    assert jnp.allclose(out, ref, atol=ATOL, rtol=RTOL), "multi-head mismatch"

    # Module-faithful single-head 2-D path, with mask (exact PyTorch signature).
    out2 = scaled_dot_product_attention(Q[0], K[0], V[0], mask)
    jax.block_until_ready(out2)
    assert out2.shape == (seq_len, d_v)
    assert jnp.allclose(out2, _reference(Q[0], K[0], V[0], mask),
                        atol=ATOL, rtol=RTOL), "single-head mismatch"

    # mask=None path (specialized kernel variant: no mask DMA / select).
    out3 = scaled_dot_product_attention(Q[0], K[0], V[0], None)
    jax.block_until_ready(out3)
    assert jnp.allclose(out3, _reference(Q[0], K[0], V[0], None),
                        atol=ATOL, rtol=RTOL), "no-mask mismatch"

    print("KERNEL_OK")
</pallas_src>

<mosaic_0001>
module attributes {stable_mosaic.version = 11 : i64} {
  func.func @_sdpa_kernel(%arg0: memref<8x8x64xf32, #tpu.memory_space<vmem>>, %arg1: memref<8x8x64xf32, #tpu.memory_space<vmem>>, %arg2: memref<8x8x64xf32, #tpu.memory_space<vmem>>, %arg3: memref<8x8xi32, #tpu.memory_space<vmem>>, %arg4: memref<8x512xf32, #tpu.memory_space<vmem>>) attributes {dimension_semantics = [], scalar_prefetch = 0 : i64, scratch_operands = 0 : i64, tpu.core_type = #tpu.core_type<tc>} {
    %c0 = arith.constant 0 : index
    %c0_0 = arith.constant 0 : index
    %c0_1 = arith.constant 0 : index
    %0 = vector.load %arg0[%c0, %c0_0, %c0_1] : memref<8x8x64xf32, #tpu.memory_space<vmem>>, vector<8x8x64xf32>
    %c0_2 = arith.constant 0 : index
    %c0_3 = arith.constant 0 : index
    %c0_4 = arith.constant 0 : index
    %1 = vector.load %arg1[%c0_2, %c0_3, %c0_4] : memref<8x8x64xf32, #tpu.memory_space<vmem>>, vector<8x8x64xf32>
    %c0_5 = arith.constant 0 : index
    %c0_6 = arith.constant 0 : index
    %c0_7 = arith.constant 0 : index
    %2 = vector.load %arg2[%c0_5, %c0_6, %c0_7] : memref<8x8x64xf32, #tpu.memory_space<vmem>>, vector<8x8x64xf32>
    "tpu.trace_start"() <{level = 10 : i32, message = "hqd,hkd->hqk"}> : () -> ()
    %cst = arith.constant dense<0.000000e+00> : vector<8x8x8xf32>
    %3 = tpu.matmul %0, %1, %cst {dimension_numbers = #tpu.dot_dimension_numbers<[2], [2], [1], [1], [0, 0, 0, 1, 1, 1], [0], [0]>} : vector<8x8x64xf32>, vector<8x8x64xf32>, vector<8x8x8xf32> -> vector<8x8x8xf32>
    "tpu.trace_stop"() : () -> ()
    %cst_8 = arith.constant 1.250000e-01 : f32
    %4 = vector.broadcast %cst_8 : f32 to vector<8x8x8xf32>
    %5 = arith.mulf %3, %4 : vector<8x8x8xf32>
    %c0_9 = arith.constant 0 : index
    %c0_10 = arith.constant 0 : index
    %6 = vector.load %arg3[%c0_9, %c0_10] : memref<8x8xi32, #tpu.memory_space<vmem>>, vector<8x8xi32>
    %c0_i32 = arith.constant 0 : i32
    %7 = vector.broadcast %c0_i32 : i32 to vector<8x8xi32>
    %8 = arith.cmpi eq, %6, %7 : vector<8x8xi32>
    %9 = vector.shape_cast %8 : vector<8x8xi1> to vector<1x8x8xi1>
    %cst_11 = arith.constant -1.000000e+09 : f32
    %10 = vector.shape_cast %9 : vector<1x8x8xi1> to vector<1x8x8xi1>
    %11 = vector.broadcast %10 : vector<1x8x8xi1> to vector<8x8x8xi1>
    %12 = vector.broadcast %cst_11 : f32 to vector<8x8x8xf32>
    %13 = arith.select %11, %12, %5 : vector<8x8x8xi1>, vector<8x8x8xf32>
    %cst_12 = arith.constant dense<0xFF800000> : vector<8x8xf32>
    %14 = vector.multi_reduction <maximumf>, %13, %cst_12 [2] : vector<8x8x8xf32> to vector<8x8xf32>
    %15 = vector.shape_cast %14 : vector<8x8xf32> to vector<8x8x1xf32>
    %16 = vector.broadcast %15 : vector<8x8x1xf32> to vector<8x8x8xf32>
    %17 = arith.subf %13, %16 : vector<8x8x8xf32>
    %18 = math.exp %17 : vector<8x8x8xf32>
    %cst_13 = arith.constant dense<0.000000e+00> : vector<8x8xf32>
    %19 = vector.multi_reduction <add>, %18, %cst_13 [2] : vector<8x8x8xf32> to vector<8x8xf32>
    %20 = vector.shape_cast %19 : vector<8x8xf32> to vector<8x8x1xf32>
    %21 = tpu.reciprocal %20 {approx = true} : vector<8x8x1xf32> -> vector<8x8x1xf32>
    %22 = vector.broadcast %21 : vector<8x8x1xf32> to vector<8x8x8xf32>
    %23 = arith.mulf %18, %22 : vector<8x8x8xf32>
    "tpu.trace_start"() <{level = 10 : i32, message = "hqk,hkd->hqd"}> : () -> ()
    %cst_14 = arith.constant dense<0.000000e+00> : vector<8x8x64xf32>
    %24 = tpu.matmul %23, %2, %cst_14 {dimension_numbers = #tpu.dot_dimension_numbers<[2], [1], [1], [2], [0, 0, 0, 1, 1, 2], [0], [0]>} : vector<8x8x8xf32>, vector<8x8x64xf32>, vector<8x8x64xf32> -> vector<8x8x64xf32>
    "tpu.trace_stop"() : () -> ()
    %25 = vector.extract_strided_slice %24 {offsets = [0, 0, 0], sizes = [1, 8, 64], strides = [1, 1, 1]} : vector<8x8x64xf32> to vector<1x8x64xf32>
    %26 = vector.shape_cast %25 : vector<1x8x64xf32> to vector<8x64xf32>
    %27 = vector.extract_strided_slice %24 {offsets = [1, 0, 0], sizes = [1, 8, 64], strides = [1, 1, 1]} : vector<8x8x64xf32> to vector<1x8x64xf32>
    %28 = vector.shape_cast %27 : vector<1x8x64xf32> to vector<8x64xf32>
    %29 = vector.extract_strided_slice %24 {offsets = [2, 0, 0], sizes = [1, 8, 64], strides = [1, 1, 1]} : vector<8x8x64xf32> to vector<1x8x64xf32>
    %30 = vector.shape_cast %29 : vector<1x8x64xf32> to vector<8x64xf32>
    %31 = vector.extract_strided_slice %24 {offsets = [3, 0, 0], sizes = [1, 8, 64], strides = [1, 1, 1]} : vector<8x8x64xf32> to vector<1x8x64xf32>
    %32 = vector.shape_cast %31 : vector<1x8x64xf32> to vector<8x64xf32>
    %33 = vector.extract_strided_slice %24 {offsets = [4, 0, 0], sizes = [1, 8, 64], strides = [1, 1, 1]} : vector<8x8x64xf32> to vector<1x8x64xf32>
    %34 = vector.shape_cast %33 : vector<1x8x64xf32> to vector<8x64xf32>
    %35 = vector.extract_strided_slice %24 {offsets = [5, 0, 0], sizes = [1, 8, 64], strides = [1, 1, 1]} : vector<8x8x64xf32> to vector<1x8x64xf32>
    %36 = vector.shape_cast %35 : vector<1x8x64xf32> to vector<8x64xf32>
    %37 = vector.extract_strided_slice %24 {offsets = [6, 0, 0], sizes = [1, 8, 64], strides = [1, 1, 1]} : vector<8x8x64xf32> to vector<1x8x64xf32>
    %38 = vector.shape_cast %37 : vector<1x8x64xf32> to vector<8x64xf32>
    %39 = vector.extract_strided_slice %24 {offsets = [7, 0, 0], sizes = [1, 8, 64], strides = [1, 1, 1]} : vector<8x8x64xf32> to vector<1x8x64xf32>
    %40 = vector.shape_cast %39 : vector<1x8x64xf32> to vector<8x64xf32>
    %41 = tpu.concatenate %26, %28, %30, %32, %34, %36, %38, %40 in 1 : vector<8x64xf32>, vector<8x64xf32>, vector<8x64xf32>, vector<8x64xf32>, vector<8x64xf32>, vector<8x64xf32>, vector<8x64xf32>, vector<8x64xf32> -> vector<8x512xf32>
    %c0_15 = arith.constant 0 : index
    %c0_16 = arith.constant 0 : index
    %42 = vector.load %arg4[%c0_15, %c0_16] : memref<8x512xf32, #tpu.memory_space<vmem>>, vector<8x512xf32>
    tpu.vector_store %arg4[%c0_15, %c0_16], %41 {strides = array<i32>} : memref<8x512xf32, #tpu.memory_space<vmem>>, vector<8x512xf32>,
    return
  }
}

</mosaic_0001>

<llo_original>
// kernel: tpu_custom_call.1
$region0: #{tpu_custom_call.1}
  #allocation0 [shape = 'u32[]', space=smem, size = 0x4, offset = 0x4, fixed_abs, tag = 'smem constant byte address 0x4 - core index']
  #allocation1 [shape = 'u32[72,128]{1,0:T(1,128)}', space=vmem, size = 0x9000, scoped, tag = 'internal scratch']
  %s0 = inlined_call_operand.hbm [shape: f32[8,8,64], index: 0, kind: input, shape index: {}]
  %s1 = inlined_call_operand.hbm [shape: f32[8,8,64], index: 1, kind: input, shape index: {}]
  %s2 = inlined_call_operand.hbm [shape: f32[8,8,64], index: 2, kind: input, shape index: {}]
  %s3 = inlined_call_operand.hbm [shape: s32[8,8], index: 3, kind: input, shape index: {}]
  %s4 = inlined_call_operand.hbm [shape: f32[8,512], index: 4, kind: output, shape index: {}]
  %s5 = sld [smem:[#allocation0]]
  $region42: #{tpu_custom_call.1} parent=0
    _
  %s7 = ssub.s32 1, %s5
  %s8 = scalar_select 0, %s7, %s5
  $region1: #{tpu_custom_call.1} parent=0
    #allocation2 [shape = 'u8[32768]{0}', space=vmem, size = 0x8000, scoped, tag = 'input window, operand 0, single buffered']
    #allocation3 [shape = 's32[1]{0}', space=sflag, size = 0x4, scoped, tag = 'scoped memory for tpu_custom_call.1']
    #allocation4 [shape = 's32[1]{0}', space=sflag, size = 0x4, scoped, tag = 'scoped memory for tpu_custom_call.1']
    #allocation5 [shape = 'u8[32768]{0}', space=vmem, size = 0x8000, scoped, tag = 'input window, operand 1, single buffered']
    #allocation6 [shape = 's32[1]{0}', space=sflag, size = 0x4, scoped, tag = 'scoped memory for tpu_custom_call.1']
    #allocation7 [shape = 'u8[32768]{0}', space=vmem, size = 0x8000, scoped, tag = 'input window, operand 2, single buffered']
    #allocation8 [shape = 'u8[4096]{0}', space=vmem, size = 0x1000, scoped, tag = 'input window, operand 3, single buffered']
    #allocation9 [shape = 's32[1]{0}', space=sflag, size = 0x4, scoped, tag = 'scoped memory for tpu_custom_call.1']
    #allocation10 [shape = 'u8[16384]{0}', space=vmem, size = 0x4000, scoped, tag = 'output window, operand 0, single buffered']
    %9 = vsyncpa [#allocation3], 0
    %10 = vsyncpa [#allocation6], 0
    %11 = vsyncpa [#allocation9], 0
    %12 = vsyncpa [#allocation4], 0
    // Predicated region
    $region2: #{tpu_custom_call.1} parent=1 // pred_check
      _
    $region3: #{tpu_custom_call.1} parent=1 // pred_check_branch
      %14 = sbr.rel (0) target = $region5
    $region4: #{tpu_custom_call.1} parent=1 // pred_region
      %16 = vsyncadd [#allocation3], 0
      %s17 = sshll.u32 %s0, 4
      %s18 = int_to_ptr.hbm [resolvable:$true] %s17
      %s19 = sshll.u32 [#allocation2], 4
      %s20 = int_to_ptr.vmem [resolvable:$true] %s19
      %25 = dma.hbm_to_vmem [thread:$0]  %s18, 1024, %s20, [#allocation3], 128, 128, 8
    $region5: #{tpu_custom_call.1} parent=1 // pred_fallthru
      _
    // Predicated region
    $region6: #{tpu_custom_call.1} parent=1 // pred_check
      _
    $region7: #{tpu_custom_call.1} parent=1 // pred_check_branch
      %27 = sbr.rel (0) target = $region9
    $region8: #{tpu_custom_call.1} parent=1 // pred_region
      %29 = vsyncadd [#allocation6], 0
      %s30 = sshll.u32 %s1, 4
      %s31 = int_to_ptr.hbm [resolvable:$true] %s30
      %s32 = sshll.u32 [#allocation5], 4
      %s33 = int_to_ptr.vmem [resolvable:$true] %s32
      %38 = dma.hbm_to_vmem [thread:$0]  %s31, 1024, %s33, [#allocation6], 128, 128, 8
    $region9: #{tpu_custom_call.1} parent=1 // pred_fallthru
      _
    // Predicated region
    $region10: #{tpu_custom_call.1} parent=1 // pred_check
      _
    $region11: #{tpu_custom_call.1} parent=1 // pred_check_branch
      %40 = sbr.rel (0) target = $region13
    $region12: #{tpu_custom_call.1} parent=1 // pred_region
      %42 = vsyncadd [#allocation6], 0
      %s43 = sshll.u32 %s2, 4
      %s44 = int_to_ptr.hbm [resolvable:$true] %s43
      %s45 = sshll.u32 [#allocation7], 4
      %s46 = int_to_ptr.vmem [resolvable:$true] %s45
      %51 = dma.hbm_to_vmem [thread:$0]  %s44, 1024, %s46, [#allocation6], 128, 128, 8
    $region13: #{tpu_custom_call.1} parent=1 // pred_fallthru
      _
    // Predicated region
    $region14: #{tpu_custom_call.1} parent=1 // pred_check
      _
    $region15: #{tpu_custom_call.1} parent=1 // pred_check_branch
      %53 = sbr.rel (0) target = $region17
    $region16: #{tpu_custom_call.1} parent=1 // pred_region
      %55 = vsyncadd [#allocation9], 0
      %s57 = sshll.u32 %s3, 4
      %s58 = int_to_ptr.hbm [resolvable:$true] %s57
      %s59 = sshll.u32 [#allocation8], 4
      %s60 = int_to_ptr.vmem [resolvable:$true] %s59
      %62 = dma.hbm_to_vmem [thread:$0]  %s58, 128, %s60, [#allocation9]
    $region17: #{tpu_custom_call.1} parent=1 // pred_fallthru
      _
    // Predicated region
    $region18: #{tpu_custom_call.1} parent=1 // pred_check
      _
    $region19: #{tpu_custom_call.1} parent=1 // pred_check_branch
      %64 = sbr.rel (0) target = $region21
    $region20: #{tpu_custom_call.1} parent=1 // pred_region
      %66 = dma.done [#allocation3], 1024
    $region21: #{tpu_custom_call.1} parent=1 // pred_fallthru
      _
    // Predicated region
    $region22: #{tpu_custom_call.1} parent=1 // pred_check
      _
    $region23: #{tpu_custom_call.1} parent=1 // pred_check_branch
      %68 = sbr.rel (0) target = $region25
    $region24: #{tpu_custom_call.1} parent=1 // pred_region
      %70 = dma.done [#allocation6], 1024
    $region25: #{tpu_custom_call.1} parent=1 // pred_fallthru
      _
    // Predicated region
    $region26: #{tpu_custom_call.1} parent=1 // pred_check
      _
    $region27: #{tpu_custom_call.1} parent=1 // pred_check_branch
      %72 = sbr.rel (0) target = $region29
    $region28: #{tpu_custom_call.1} parent=1 // pred_region
      %74 = dma.done [#allocation6], 1024
    $region29: #{tpu_custom_call.1} parent=1 // pred_fallthru
      _
    // Predicated region
    $region30: #{tpu_custom_call.1} parent=1 // pred_check
      _
    $region31: #{tpu_custom_call.1} parent=1 // pred_check_branch
      %76 = sbr.rel (0) target = $region33
    $region32: #{tpu_custom_call.1} parent=1 // pred_region
      %78 = dma.done [#allocation9], 128
    $region33: #{tpu_custom_call.1} parent=1 // pred_fallthru
      _
    %v79 = vld [vmem:[#allocation2] sm:$0xff]
    %v80 = vld [vmem:[#allocation2 + $0x8] sm:$0xff]
    %v81 = vld [vmem:[#allocation2 + $0x10] sm:$0xff]
    %v82 = vld [vmem:[#allocation2 + $0x18] sm:$0xff]
    %v83 = vld [vmem:[#allocation2 + $0x20] sm:$0xff]
    %v84 = vld [vmem:[#allocation2 + $0x28] sm:$0xff]
    %v85 = vld [vmem:[#allocation2 + $0x30] sm:$0xff]
    %v86 = vld [vmem:[#allocation2 + $0x38] sm:$0xff]
    %v87 = vld [vmem:[#allocation5] sm:$0xff]
    %v88 = vld [vmem:[#allocation5 + $0x8] sm:$0xff]
    %v89 = vld [vmem:[#allocation5 + $0x10] sm:$0xff]
    %v90 = vld [vmem:[#allocation5 + $0x18] sm:$0xff]
    %v91 = vld [vmem:[#allocation5 + $0x20] sm:$0xff]
    %v92 = vld [vmem:[#allocation5 + $0x28] sm:$0xff]
    %v93 = vld [vmem:[#allocation5 + $0x30] sm:$0xff]
    %v94 = vld [vmem:[#allocation5 + $0x38] sm:$0xff]
    %v95 = vld [vmem:[#allocation7] sm:$0xff]
    %v96 = vld [vmem:[#allocation7 + $0x8] sm:$0xff]
    %v97 = vld [vmem:[#allocation7 + $0x10] sm:$0xff]
    %v98 = vld [vmem:[#allocation7 + $0x18] sm:$0xff]
    %v99 = vld [vmem:[#allocation7 + $0x20] sm:$0xff]
    %v100 = vld [vmem:[#allocation7 + $0x28] sm:$0xff]
    %v101 = vld [vmem:[#allocation7 + $0x30] sm:$0xff]
    %v102 = vld [vmem:[#allocation7 + $0x38] sm:$0xff]
    %vm103 = vcmask 523264
    %v105 = vsel %vm103, %v79, 0
    %v108 = vsel %vm103, %v87, 0
    %110 = vmatpush.xpose.msra.mxu0 0.0
    %111 = vmatpush.xpose.msra.mxu0 0.0
    %112 = vmatpush.xpose.msra.mxu0 0.0
    %113 = vmatpush.xpose.msra.mxu0 0.0
    %114 = vmatpush.xpose.msra.mxu0 0.0
    %115 = vmatpush.xpose.msra.mxu0 0.0
    %116 = vmatpush.xpose.msra.mxu0 0.0
    %117 = vmatpush.xpose.msra.mxu0 0.0
    %118 = vmatpush.xpose.msra.mxu0 0.0
    %119 = vmatpush.xpose.msra.mxu0 0.0
    %120 = vmatpush.xpose.msra.mxu0 0.0
    %121 = vmatpush.xpose.msra.mxu0 0.0
    %122 = vmatpush.xpose.msra.mxu0 0.0
    %123 = vmatpush.xpose.msra.mxu0 0.0
    %124 = vmatpush.xpose.msra.mxu0 0.0
    %125 = vmatpush.xpose.msra.mxu0 %v108
    %126 = vmatmul.f32.gmra.mxu0 %v105
    %v127 = vpop.f32.mrf.mxu0
    %v128 = vadd.f32 0.0, %v127
    %129 = vdwg.mxu0
    %v131 = vsel %vm103, %v80, 0
    %v134 = vsel %vm103, %v88, 0
    %136 = vmatpush.xpose.msra.mxu0 0.0
    %137 = vmatpush.xpose.msra.mxu0 0.0
    %138 = vmatpush.xpose.msra.mxu0 0.0
    %139 = vmatpush.xpose.msra.mxu0 0.0
    %140 = vmatpush.xpose.msra.mxu0 0.0
    %141 = vmatpush.xpose.msra.mxu0 0.0
    %142 = vmatpush.xpose.msra.mxu0 0.0
    %143 = vmatpush.xpose.msra.mxu0 0.0
    %144 = vmatpush.xpose.msra.mxu0 0.0
    %145 = vmatpush.xpose.msra.mxu0 0.0
    %146 = vmatpush.xpose.msra.mxu0 0.0
    %147 = vmatpush.xpose.msra.mxu0 0.0
    %148 = vmatpush.xpose.msra.mxu0 0.0
    %149 = vmatpush.xpose.msra.mxu0 0.0
    %150 = vmatpush.xpose.msra.mxu0 0.0
    %151 = vmatpush.xpose.msra.mxu0 %v134
    %152 = vmatmul.f32.gmra.mxu0 %v131
    %v153 = vpop.f32.mrf.mxu0
    %v154 = vadd.f32 0.0, %v153
    %155 = vdwg.mxu0
    %v157 = vsel %vm103, %v81, 0
    %v160 = vsel %vm103, %v89, 0
    %162 = vmatpush.xpose.msra.mxu0 0.0
    %163 = vmatpush.xpose.msra.mxu0 0.0
    %164 = vmatpush.xpose.msra.mxu0 0.0
    %165 = vmatpush.xpose.msra.mxu0 0.0
    %166 = vmatpush.xpose.msra.mxu0 0.0
    %167 = vmatpush.xpose.msra.mxu0 0.0
    %168 = vmatpush.xpose.msra.mxu0 0.0
    %169 = vmatpush.xpose.msra.mxu0 0.0
    %170 = vmatpush.xpose.msra.mxu0 0.0
    %171 = vmatpush.xpose.msra.mxu0 0.0
    %172 = vmatpush.xpose.msra.mxu0 0.0
    %173 = vmatpush.xpose.msra.mxu0 0.0
    %174 = vmatpush.xpose.msra.mxu0 0.0
    %175 = vmatpush.xpose.msra.mxu0 0.0
    %176 = vmatpush.xpose.msra.mxu0 0.0
    %177 = vmatpush.xpose.msra.mxu0 %v160
    %178 = vmatmul.f32.gmra.mxu0 %v157
    %v179 = vpop.f32.mrf.mxu0
    %v180 = vadd.f32 0.0, %v179
    %181 = vdwg.mxu0
    %v183 = vsel %vm103, %v82, 0
    %v186 = vsel %vm103, %v90, 0
    %188 = vmatpush.xpose.msra.mxu0 0.0
    %189 = vmatpush.xpose.msra.mxu0 0.0
    %190 = vmatpush.xpose.msra.mxu0 0.0
    %191 = vmatpush.xpose.msra.mxu0 0.0
    %192 = vmatpush.xpose.msra.mxu0 0.0
    %193 = vmatpush.xpose.msra.mxu0 0.0
    %194 = vmatpush.xpose.msra.mxu0 0.0
    %195 = vmatpush.xpose.msra.mxu0 0.0
    %196 = vmatpush.xpose.msra.mxu0 0.0
    %197 = vmatpush.xpose.msra.mxu0 0.0
    %198 = vmatpush.xpose.msra.mxu0 0.0
    %199 = vmatpush.xpose.msra.mxu0 0.0
    %200 = vmatpush.xpose.msra.mxu0 0.0
    %201 = vmatpush.xpose.msra.mxu0 0.0
    %202 = vmatpush.xpose.msra.mxu0 0.0
    %203 = vmatpush.xpose.msra.mxu0 %v186
    %204 = vmatmul.f32.gmra.mxu0 %v183
    %v205 = vpop.f32.mrf.mxu0
    %v206 = vadd.f32 0.0, %v205
    %207 = vdwg.mxu0
    %v209 = vsel %vm103, %v83, 0
    %v212 = vsel %vm103, %v91, 0
    %214 = vmatpush.xpose.msra.mxu0 0.0
    %215 = vmatpush.xpose.msra.mxu0 0.0
    %216 = vmatpush.xpose.msra.mxu0 0.0
    %217 = vmatpush.xpose.msra.mxu0 0.0
    %218 = vmatpush.xpose.msra.mxu0 0.0
    %219 = vmatpush.xpose.msra.mxu0 0.0
    %220 = vmatpush.xpose.msra.mxu0 0.0
    %221 = vmatpush.xpose.msra.mxu0 0.0
    %222 = vmatpush.xpose.msra.mxu0 0.0
    %223 = vmatpush.xpose.msra.mxu0 0.0
    %224 = vmatpush.xpose.msra.mxu0 0.0
    %225 = vmatpush.xpose.msra.mxu0 0.0
    %226 = vmatpush.xpose.msra.mxu0 0.0
    %227 = vmatpush.xpose.msra.mxu0 0.0
    %228 = vmatpush.xpose.msra.mxu0 0.0
    %229 = vmatpush.xpose.msra.mxu0 %v212
    %230 = vmatmul.f32.gmra.mxu0 %v209
    %v231 = vpop.f32.mrf.mxu0
    %v232 = vadd.f32 0.0, %v231
    %233 = vdwg.mxu0
    %v235 = vsel %vm103, %v84, 0
    %v238 = vsel %vm103, %v92, 0
    %240 = vmatpush.xpose.msra.mxu0 0.0
    %241 = vmatpush.xpose.msra.mxu0 0.0
    %242 = vmatpush.xpose.msra.mxu0 0.0
    %243 = vmatpush.xpose.msra.mxu0 0.0
    %244 = vmatpush.xpose.msra.mxu0 0.0
    %245 = vmatpush.xpose.msra.mxu0 0.0
    %246 = vmatpush.xpose.msra.mxu0 0.0
    %247 = vmatpush.xpose.msra.mxu0 0.0
    %248 = vmatpush.xpose.msra.mxu0 0.0
    %249 = vmatpush.xpose.msra.mxu0 0.0
    %250 = vmatpush.xpose.msra.mxu0 0.0
    %251 = vmatpush.xpose.msra.mxu0 0.0
    %252 = vmatpush.xpose.msra.mxu0 0.0
    %253 = vmatpush.xpose.msra.mxu0 0.0
    %254 = vmatpush.xpose.msra.mxu0 0.0
    %255 = vmatpush.xpose.msra.mxu0 %v238
    %256 = vmatmul.f32.gmra.mxu0 %v235
    %v257 = vpop.f32.mrf.mxu0
    %v258 = vadd.f32 0.0, %v257
    %259 = vdwg.mxu0
    %v261 = vsel %vm103, %v85, 0
    %v264 = vsel %vm103, %v93, 0
    %266 = vmatpush.xpose.msra.mxu0 0.0
    %267 = vmatpush.xpose.msra.mxu0 0.0
    %268 = vmatpush.xpose.msra.mxu0 0.0
    %269 = vmatpush.xpose.msra.mxu0 0.0
    %270 = vmatpush.xpose.msra.mxu0 0.0
    %271 = vmatpush.xpose.msra.mxu0 0.0
    %272 = vmatpush.xpose.msra.mxu0 0.0
    %273 = vmatpush.xpose.msra.mxu0 0.0
    %274 = vmatpush.xpose.msra.mxu0 0.0
    %275 = vmatpush.xpose.msra.mxu0 0.0
    %276 = vmatpush.xpose.msra.mxu0 0.0
    %277 = vmatpush.xpose.msra.mxu0 0.0
    %278 = vmatpush.xpose.msra.mxu0 0.0
    %279 = vmatpush.xpose.msra.mxu0 0.0
    %280 = vmatpush.xpose.msra.mxu0 0.0
    %281 = vmatpush.xpose.msra.mxu0 %v264
    %282 = vmatmul.f32.gmra.mxu0 %v261
    %v283 = vpop.f32.mrf.mxu0
    %v284 = vadd.f32 0.0, %v283
    %285 = vdwg.mxu0
    %v287 = vsel %vm103, %v86, 0
    %v290 = vsel %vm103, %v94, 0
    %292 = vmatpush.xpose.msra.mxu0 0.0
    %293 = vmatpush.xpose.msra.mxu0 0.0
    %294 = vmatpush.xpose.msra.mxu0 0.0
    %295 = vmatpush.xpose.msra.mxu0 0.0
    %296 = vmatpush.xpose.msra.mxu0 0.0
    %297 = vmatpush.xpose.msra.mxu0 0.0
    %298 = vmatpush.xpose.msra.mxu0 0.0
    %299 = vmatpush.xpose.msra.mxu0 0.0
    %300 = vmatpush.xpose.msra.mxu0 0.0
    %301 = vmatpush.xpose.msra.mxu0 0.0
    %302 = vmatpush.xpose.msra.mxu0 0.0
    %303 = vmatpush.xpose.msra.mxu0 0.0
    %304 = vmatpush.xpose.msra.mxu0 0.0
    %305 = vmatpush.xpose.msra.mxu0 0.0
    %306 = vmatpush.xpose.msra.mxu0 0.0
    %307 = vmatpush.xpose.msra.mxu0 %v290
    %308 = vmatmul.f32.gmra.mxu0 %v287
    %v309 = vpop.f32.mrf.mxu0
    %v310 = vadd.f32 0.0, %v309
    %311 = vdwg.mxu0
    %v312 = vmul.f32 %v128, 0.125
    %v313 = vmul.f32 %v154, 0.125
    %v314 = vmul.f32 %v180, 0.125
    %v315 = vmul.f32 %v206, 0.125
    %v316 = vmul.f32 %v232, 0.125
    %v317 = vmul.f32 %v258, 0.125
    %v318 = vmul.f32 %v284, 0.125
    %v319 = vmul.f32 %v310, 0.125
    %v320 = vld [vmem:[#allocation8] sm:$0xff]
    %vm321 = vcmp.eq.s32.totalorder %v320, 0
    %v322 = vsel %vm321, 1, 0
    %vm323 = vcmp.eq.s32.totalorder %v322, 1
    %v324 = vsel %vm323, -1e+09, %v312
    %v325 = vsel %vm323, -1e+09, %v313
    %v326 = vsel %vm323, -1e+09, %v314
    %v327 = vsel %vm323, -1e+09, %v315
    %v328 = vsel %vm323, -1e+09, %v316
    %v329 = vsel %vm323, -1e+09, %v317
    %v330 = vsel %vm323, -1e+09, %v318
    %v331 = vsel %vm323, -1e+09, %v319
    %vm332 = vcmask 64512
    %v333 = vsel %vm332, %v324, -inf
    %334 = vmax.xlane.f32.xlu0 %v333
    %v335 = vpop.xlane.xlu0 %334
    %v336 = vsel %vm332, %v325, -inf
    %337 = vmax.xlane.f32.xlu0 %v336
    %v338 = vpop.xlane.xlu0 %337
    %v339 = vsel %vm332, %v326, -inf
    %340 = vmax.xlane.f32.xlu0 %v339
    %v341 = vpop.xlane.xlu0 %340
    %v342 = vsel %vm332, %v327, -inf
    %343 = vmax.xlane.f32.xlu0 %v342
    %v344 = vpop.xlane.xlu0 %343
    %v345 = vsel %vm332, %v328, -inf
    %346 = vmax.xlane.f32.xlu0 %v345
    %v347 = vpop.xlane.xlu0 %346
    %v348 = vsel %vm332, %v329, -inf
    %349 = vmax.xlane.f32.xlu0 %v348
    %v350 = vpop.xlane.xlu0 %349
    %v351 = vsel %vm332, %v330, -inf
    %352 = vmax.xlane.f32.xlu0 %v351
    %v353 = vpop.xlane.xlu0 %352
    %v354 = vsel %vm332, %v331, -inf
    %355 = vmax.xlane.f32.xlu0 %v354
    %v356 = vpop.xlane.xlu0 %355
    %v357 = vsub.f32 %v324, %v335
    %v358 = vsub.f32 %v325, %v338
    %v359 = vsub.f32 %v326, %v341
    %v360 = vsub.f32 %v327, %v344
    %v361 = vsub.f32 %v328, %v347
    %v362 = vsub.f32 %v329, %v350
    %v363 = vsub.f32 %v330, %v353
    %v364 = vsub.f32 %v331, %v356
    %v365 = vmul.f32 %v357, 1.442695
    %v366 = vpow.pop %v365
    %v367 = vmul.f32 %v358, 1.442695
    %v368 = vpow.pop %v367
    %v369 = vmul.f32 %v359, 1.442695
    %v370 = vpow.pop %v369
    %v371 = vmul.f32 %v360, 1.442695
    %v372 = vpow.pop %v371
    %v373 = vmul.f32 %v361, 1.442695
    %v374 = vpow.pop %v373
    %v375 = vmul.f32 %v362, 1.442695
    %v376 = vpow.pop %v375
    %v377 = vmul.f32 %v363, 1.442695
    %v378 = vpow.pop %v377
    %v379 = vmul.f32 %v364, 1.442695
    %v380 = vpow.pop %v379
    %v381 = vsel %vm332, %v366, 0.0
    %382 = vadd.xlane.f32.xlu0 %v381
    %v383 = vpop.xlane.xlu0 %382
    %v384 = vsel %vm332, %v368, 0.0
    %385 = vadd.xlane.f32.xlu0 %v384
    %v386 = vpop.xlane.xlu0 %385
    %v387 = vsel %vm332, %v370, 0.0
    %388 = vadd.xlane.f32.xlu0 %v387
    %v389 = vpop.xlane.xlu0 %388
    %v390 = vsel %vm332, %v372, 0.0
    %391 = vadd.xlane.f32.xlu0 %v390
    %v392 = vpop.xlane.xlu0 %391
    %v393 = vsel %vm332, %v374, 0.0
    %394 = vadd.xlane.f32.xlu0 %v393
    %v395 = vpop.xlane.xlu0 %394
    %v396 = vsel %vm332, %v376, 0.0
    %397 = vadd.xlane.f32.xlu0 %v396
    %v398 = vpop.xlane.xlu0 %397
    %v399 = vsel %vm332, %v378, 0.0
    %400 = vadd.xlane.f32.xlu0 %v399
    %v401 = vpop.xlane.xlu0 %400
    %v402 = vsel %vm332, %v380, 0.0
    %403 = vadd.xlane.f32.xlu0 %v402
    %v404 = vpop.xlane.xlu0 %403
    %v405 = vrcp.pop %v383
    %v406 = vrcp.pop %v386
    %v407 = vrcp.pop %v389
    %v408 = vrcp.pop %v392
    %v409 = vrcp.pop %v395
    %v410 = vrcp.pop %v398
    %v411 = vrcp.pop %v401
    %v412 = vrcp.pop %v404
    %v413 = vmul.f32 %v366, %v405
    %v414 = vmul.f32 %v368, %v406
    %v415 = vmul.f32 %v370, %v407
    %v416 = vmul.f32 %v372, %v408
    %v417 = vmul.f32 %v374, %v409
    %v418 = vmul.f32 %v376, %v410
    %v419 = vmul.f32 %v378, %v411
    %v420 = vmul.f32 %v380, %v412
    %v422 = vsel %vm332, %v413, 0
    %424 = vmatpush.msra.mxu0 0.0
    %425 = vmatpush.msra.mxu0 0.0
    %426 = vmatpush.msra.mxu0 0.0
    %427 = vmatpush.msra.mxu0 0.0
    %428 = vmatpush.msra.mxu0 0.0
    %429 = vmatpush.msra.mxu0 0.0
    %430 = vmatpush.msra.mxu0 0.0
    %431 = vmatpush.msra.mxu0 0.0
    %432 = vmatpush.msra.mxu0 0.0
    %433 = vmatpush.msra.mxu0 0.0
    %434 = vmatpush.msra.mxu0 0.0
    %435 = vmatpush.msra.mxu0 0.0
    %436 = vmatpush.msra.mxu0 0.0
    %437 = vmatpush.msra.mxu0 0.0
    %438 = vmatpush.msra.mxu0 0.0
    %439 = vmatpush.msra.mxu0 %v95
    %440 = vmatmul.f32.gmra.mxu0 %v422
    %v441 = vpop.f32.mrf.mxu0
    %v442 = vadd.f32 0.0, %v441
    %443 = vdwg.mxu0
    %v445 = vsel %vm332, %v414, 0
    %447 = vmatpush.msra.mxu0 0.0
    %448 = vmatpush.msra.mxu0 0.0
    %449 = vmatpush.msra.mxu0 0.0
    %450 = vmatpush.msra.mxu0 0.0
    %451 = vmatpush.msra.mxu0 0.0
    %452 = vmatpush.msra.mxu0 0.0
    %453 = vmatpush.msra.mxu0 0.0
    %454 = vmatpush.msra.mxu0 0.0
    %455 = vmatpush.msra.mxu0 0.0
    %456 = vmatpush.msra.mxu0 0.0
    %457 = vmatpush.msra.mxu0 0.0
    %458 = vmatpush.msra.mxu0 0.0
    %459 = vmatpush.msra.mxu0 0.0
    %460 = vmatpush.msra.mxu0 0.0
    %461 = vmatpush.msra.mxu0 0.0
    %462 = vmatpush.msra.mxu0 %v96
    %463 = vmatmul.f32.gmra.mxu0 %v445
    %v464 = vpop.f32.mrf.mxu0
    %v465 = vadd.f32 0.0, %v464
    %466 = vdwg.mxu0
    %v468 = vsel %vm332, %v415, 0
    %470 = vmatpush.msra.mxu0 0.0
    %471 = vmatpush.msra.mxu0 0.0
    %472 = vmatpush.msra.mxu0 0.0
    %473 = vmatpush.msra.mxu0 0.0
    %474 = vmatpush.msra.mxu0 0.0
    %475 = vmatpush.msra.mxu0 0.0
    %476 = vmatpush.msra.mxu0 0.0
    %477 = vmatpush.msra.mxu0 0.0
    %478 = vmatpush.msra.mxu0 0.0
    %479 = vmatpush.msra.mxu0 0.0
    %480 = vmatpush.msra.mxu0 0.0
    %481 = vmatpush.msra.mxu0 0.0
    %482 = vmatpush.msra.mxu0 0.0
    %483 = vmatpush.msra.mxu0 0.0
    %484 = vmatpush.msra.mxu0 0.0
    %485 = vmatpush.msra.mxu0 %v97
    %486 = vmatmul.f32.gmra.mxu0 %v468
    %v487 = vpop.f32.mrf.mxu0
    %v488 = vadd.f32 0.0, %v487
    %489 = vdwg.mxu0
    %v491 = vsel %vm332, %v416, 0
    %493 = vmatpush.msra.mxu0 0.0
    %494 = vmatpush.msra.mxu0 0.0
    %495 = vmatpush.msra.mxu0 0.0
    %496 = vmatpush.msra.mxu0 0.0
    %497 = vmatpush.msra.mxu0 0.0
    %498 = vmatpush.msra.mxu0 0.0
    %499 = vmatpush.msra.mxu0 0.0
    %500 = vmatpush.msra.mxu0 0.0
    %501 = vmatpush.msra.mxu0 0.0
    %502 = vmatpush.msra.mxu0 0.0
    %503 = vmatpush.msra.mxu0 0.0
    %504 = vmatpush.msra.mxu0 0.0
    %505 = vmatpush.msra.mxu0 0.0
    %506 = vmatpush.msra.mxu0 0.0
    %507 = vmatpush.msra.mxu0 0.0
    %508 = vmatpush.msra.mxu0 %v98
    %509 = vmatmul.f32.gmra.mxu0 %v491
    %v510 = vpop.f32.mrf.mxu0
    %v511 = vadd.f32 0.0, %v510
    %512 = vdwg.mxu0
    %v514 = vsel %vm332, %v417, 0
    %516 = vmatpush.msra.mxu0 0.0
    %517 = vmatpush.msra.mxu0 0.0
    %518 = vmatpush.msra.mxu0 0.0
    %519 = vmatpush.msra.mxu0 0.0
    %520 = vmatpush.msra.mxu0 0.0
    %521 = vmatpush.msra.mxu0 0.0
    %522 = vmatpush.msra.mxu0 0.0
    %523 = vmatpush.msra.mxu0 0.0
    %524 = vmatpush.msra.mxu0 0.0
    %525 = vmatpush.msra.mxu0 0.0
    %526 = vmatpush.msra.mxu0 0.0
    %527 = vmatpush.msra.mxu0 0.0
    %528 = vmatpush.msra.mxu0 0.0
    %529 = vmatpush.msra.mxu0 0.0
    %530 = vmatpush.msra.mxu0 0.0
    %531 = vmatpush.msra.mxu0 %v99
    %532 = vmatmul.f32.gmra.mxu0 %v514
    %v533 = vpop.f32.mrf.mxu0
    %v534 = vadd.f32 0.0, %v533
    %535 = vdwg.mxu0
    %v537 = vsel %vm332, %v418, 0
    %539 = vmatpush.msra.mxu0 0.0
    %540 = vmatpush.msra.mxu0 0.0
    %541 = vmatpush.msra.mxu0 0.0
    %542 = vmatpush.msra.mxu0 0.0
    %543 = vmatpush.msra.mxu0 0.0
    %544 = vmatpush.msra.mxu0 0.0
    %545 = vmatpush.msra.mxu0 0.0
    %546 = vmatpush.msra.mxu0 0.0
    %547 = vmatpush.msra.mxu0 0.0
    %548 = vmatpush.msra.mxu0 0.0
    %549 = vmatpush.msra.mxu0 0.0
    %550 = vmatpush.msra.mxu0 0.0
    %551 = vmatpush.msra.mxu0 0.0
    %552 = vmatpush.msra.mxu0 0.0
    %553 = vmatpush.msra.mxu0 0.0
    %554 = vmatpush.msra.mxu0 %v100
    %555 = vmatmul.f32.gmra.mxu0 %v537
    %v556 = vpop.f32.mrf.mxu0
    %v557 = vadd.f32 0.0, %v556
    %558 = vdwg.mxu0
    %v560 = vsel %vm332, %v419, 0
    %562 = vmatpush.msra.mxu0 0.0
    %563 = vmatpush.msra.mxu0 0.0
    %564 = vmatpush.msra.mxu0 0.0
    %565 = vmatpush.msra.mxu0 0.0
    %566 = vmatpush.msra.mxu0 0.0
    %567 = vmatpush.msra.mxu0 0.0
    %568 = vmatpush.msra.mxu0 0.0
    %569 = vmatpush.msra.mxu0 0.0
    %570 = vmatpush.msra.mxu0 0.0
    %571 = vmatpush.msra.mxu0 0.0
    %572 = vmatpush.msra.mxu0 0.0
    %573 = vmatpush.msra.mxu0 0.0
    %574 = vmatpush.msra.mxu0 0.0
    %575 = vmatpush.msra.mxu0 0.0
    %576 = vmatpush.msra.mxu0 0.0
    %577 = vmatpush.msra.mxu0 %v101
    %578 = vmatmul.f32.gmra.mxu0 %v560
    %v579 = vpop.f32.mrf.mxu0
    %v580 = vadd.f32 0.0, %v579
    %581 = vdwg.mxu0
    %v583 = vsel %vm332, %v420, 0
    %585 = vmatpush.msra.mxu0 0.0
    %586 = vmatpush.msra.mxu0 0.0
    %587 = vmatpush.msra.mxu0 0.0
    %588 = vmatpush.msra.mxu0 0.0
    %589 = vmatpush.msra.mxu0 0.0
    %590 = vmatpush.msra.mxu0 0.0
    %591 = vmatpush.msra.mxu0 0.0
    %592 = vmatpush.msra.mxu0 0.0
    %593 = vmatpush.msra.mxu0 0.0
    %594 = vmatpush.msra.mxu0 0.0
    %595 = vmatpush.msra.mxu0 0.0
    %596 = vmatpush.msra.mxu0 0.0
    %597 = vmatpush.msra.mxu0 0.0
    %598 = vmatpush.msra.mxu0 0.0
    %599 = vmatpush.msra.mxu0 0.0
    %600 = vmatpush.msra.mxu0 %v102
    %601 = vmatmul.f32.gmra.mxu0 %v583
    %v602 = vpop.f32.mrf.mxu0
    %v603 = vadd.f32 0.0, %v602
    %604 = vdwg.mxu0
    %606 = vrot.lane.b32.xlu0 %v465, 64
    %v607 = vpop.permute.xlu0 %606
    %610 = vrot.lane.b32.xlu0 %v511, 64
    %v611 = vpop.permute.xlu0 %610
    %614 = vrot.lane.b32.xlu0 %v557, 64
    %v615 = vpop.permute.xlu0 %614
    %618 = vrot.lane.b32.xlu0 %v603, 64
    %v619 = vpop.permute.xlu0 %618
    %v621 = vsel %vm103, %v442, %v607
    %v622 = vsel %vm103, %v488, %v611
    %v623 = vsel %vm103, %v534, %v615
    %v624 = vsel %vm103, %v580, %v619
    %625 = vst [vmem:[#allocation10] sm:$0xff] %v621
    %626 = vst [vmem:[#allocation10 + $0x8] sm:$0xff] %v622
    %627 = vst [vmem:[#allocation10 + $0x10] sm:$0xff] %v623
    %628 = vst [vmem:[#allocation10 + $0x18] sm:$0xff] %v624
    // Predicated region
    $region34: #{tpu_custom_call.1} parent=1 // pred_check
      _
    $region35: #{tpu_custom_call.1} parent=1 // pred_check_branch
      %630 = sbr.rel (0) target = $region37
    $region36: #{tpu_custom_call.1} parent=1 // pred_region
      %632 = vsyncadd [#allocation4], 0
      %s634 = sshll.u32 [#allocation10], 4
      %s635 = int_to_ptr.vmem [resolvable:$true] %s634
      %s636 = sshll.u32 %s4, 4
      %s637 = int_to_ptr.hbm [resolvable:$true] %s636
      %639 = dma.vmem_to_hbm [thread:$0]  %s635, 512, %s637, [#allocation4]
    $region37: #{tpu_custom_call.1} parent=1 // pred_fallthru
      _
    // Predicated region
    $region38: #{tpu_custom_call.1} parent=1 // pred_check
      _
    $region39: #{tpu_custom_call.1} parent=1 // pred_check_branch
      %641 = sbr.rel (0) target = $region41
    $region40: #{tpu_custom_call.1} parent=1 // pred_region
      %643 = dma.done [#allocation4], 512
    $region41: #{tpu_custom_call.1} parent=1 // pred_fallthru
      _
    %644 = vsyncpa [#allocation3], 1
    %645 = vsyncpa [#allocation6], 1
    %646 = vsyncpa [#allocation9], 1
    %647 = vsyncpa [#allocation4], 1

</llo_original>
